<compile_context>
chip_gen: v5e
topology: v5e:2x2
jax: 0.10.0
libtpu: 0.0.40
codegen_flags: <defaults>
</compile_context>

<pallas_src>
import functools

import jax
import jax.numpy as jnp
from jax import lax
from jax.experimental import pallas as pl
from jax.experimental.pallas import tpu as pltpu


def ncf_mlp_kernel(feats_ref, w1_ref, b1_ref, w2_ref, b2_ref, wf_ref, bf_ref,
                   out_ref):
    """Fused MLP: two Linear+ReLU hidden layers, final Linear+sigmoid.

    Per grid step (TB = batch tile):
      feats_ref : (TB, 2F)  bf16   streamed
      w1_ref    : (2F, H1)  bf16   resident
      b1_ref    : (1, H1)   f32    resident
      w2_ref    : (H1, H2)  bf16   resident
      b2_ref    : (1, H2)   f32    resident
      wf_ref    : (1, H2)   f32    resident (final fc weight as a row)
      bf_ref    : (1, 1)    f32    SMEM scalar (final fc bias)
      out_ref   : (1, TB)   f32    lane-dense output row
    """
    feats = feats_ref[...]                                     # (TB, 2F) bf16

    # hidden layer 0: Linear -> ReLU (Dropout is identity at eval)
    h1 = jnp.dot(feats, w1_ref[...], preferred_element_type=jnp.float32)
    h1 = jnp.maximum(h1 + b1_ref[...], 0.0)                    # (TB, H1) f32

    # hidden layer 1: Linear -> ReLU
    h2 = jnp.dot(h1.astype(jnp.bfloat16), w2_ref[...],
                 preferred_element_type=jnp.float32)
    h2 = jnp.maximum(h2 + b2_ref[...], 0.0)                    # (TB, H2) f32
    # (the extra relu in forward() is a no-op after the ReLU above)

    # final fc -> sigmoid, computed as (1,H2) . (TB,H2)^T -> (1,TB) so the
    # stored block is lane-dense instead of a lane-width-1 column.
    logits = lax.dot_general(
        wf_ref[...], h2,
        dimension_numbers=(((1,), (1,)), ((), ())),
        preferred_element_type=jnp.float32)                    # (1, TB)
    logits = logits + bf_ref[0, 0]
    out_ref[...] = jax.nn.sigmoid(logits)


def ncf_forward(users, apt, params, *, block_b=512):
    """Full NCF forward. Embedding gathers + concat are glue (plain JAX);
    the MLP (matmuls / activations / sigmoid) runs in the Pallas kernel."""
    user_emb = params["user_emb"]   # (n_users, n_factors)
    apt_emb = params["apt_emb"]     # (n_apt, n_factors)

    # Embedding lookup + concat (glue), streamed to the kernel in bf16.
    feats = jnp.concatenate([user_emb[users], apt_emb[apt]], axis=1)
    feats = feats.astype(jnp.bfloat16)                         # (B, 2F)

    B, F2 = feats.shape
    H1 = params["w1"].shape[1]
    H2 = params["w2"].shape[1]

    num_tiles = pl.cdiv(B, block_b)
    b_padded = num_tiles * block_b
    if b_padded != B:
        feats = jnp.pad(feats, ((0, b_padded - B), (0, 0)))

    w1 = params["w1"].astype(jnp.bfloat16)
    w2 = params["w2"].astype(jnp.bfloat16)
    wf_row = params["wf"].reshape(1, H2).astype(jnp.float32)
    b1 = params["b1"].astype(jnp.float32)
    b2 = params["b2"].astype(jnp.float32)
    bf = params["bf"].astype(jnp.float32)

    def resident(shape):
        # Full-array block, constant index_map -> stays VMEM-resident.
        return pl.BlockSpec(shape, lambda i: (0,) * len(shape))

    out = pl.pallas_call(
        ncf_mlp_kernel,
        out_shape=jax.ShapeDtypeStruct((1, b_padded), jnp.float32),
        grid=(num_tiles,),
        in_specs=[
            pl.BlockSpec((block_b, F2), lambda i: (i, 0)),     # feats: streamed
            resident((F2, H1)),                                # w1
            resident((1, H1)),                                 # b1
            resident((H1, H2)),                                # w2
            resident((1, H2)),                                 # b2
            resident((1, H2)),                                 # wf (row)
            pl.BlockSpec(memory_space=pltpu.MemorySpace.SMEM),  # bf scalar
        ],
        out_specs=pl.BlockSpec((1, block_b), lambda i: (0, i)),
        compiler_params=pltpu.CompilerParams(
            dimension_semantics=("parallel",)),
    )(feats, w1, b1, w2, b2, wf_row, bf)

    return out[0, :B].reshape(B, 1)


def init_params(key, n_users, n_apt, n_factors, hidden):
    """Deterministic parameter init matching the module's shapes."""
    ks = jax.random.split(key, 10)
    p = {}
    p["user_emb"] = jax.random.normal(ks[0], (n_users, n_factors), jnp.float32)
    p["apt_emb"] = jax.random.normal(ks[1], (n_apt, n_factors), jnp.float32)

    in0 = n_factors * 2
    # Linear weights stored as (in, out); scale ~ 1/sqrt(in) like torch default.
    p["w1"] = jax.random.uniform(ks[2], (in0, hidden[0]), jnp.float32,
                                 -1.0, 1.0) / jnp.sqrt(in0)
    p["b1"] = jax.random.uniform(ks[3], (1, hidden[0]), jnp.float32,
                                 -1.0, 1.0) / jnp.sqrt(in0)
    p["w2"] = jax.random.uniform(ks[4], (hidden[0], hidden[1]), jnp.float32,
                                 -1.0, 1.0) / jnp.sqrt(hidden[0])
    p["b2"] = jax.random.uniform(ks[5], (1, hidden[1]), jnp.float32,
                                 -1.0, 1.0) / jnp.sqrt(hidden[0])
    p["wf"] = jax.random.uniform(ks[6], (hidden[1], 1), jnp.float32,
                                 -1.0, 1.0) / jnp.sqrt(hidden[1])
    p["bf"] = jax.random.uniform(ks[7], (1, 1), jnp.float32,
                                 -1.0, 1.0) / jnp.sqrt(hidden[1])
    return p


if __name__ == "__main__":
    # Small, deterministic example consistent with the module.
    n_users, n_apt = 48, 40
    n_factors = 16
    hidden = [32, 16]
    batch = 200          # deliberately NOT a multiple of the batch tile
    block_b = 128        # small tile for the demo; use 512-2048 for large B

    key = jax.random.PRNGKey(0)
    kp, ku, ka = jax.random.split(key, 3)

    params = init_params(kp, n_users, n_apt, n_factors, hidden)
    users = jax.random.randint(ku, (batch,), 0, n_users, dtype=jnp.int32)
    apt = jax.random.randint(ka, (batch,), 0, n_apt, dtype=jnp.int32)

    fwd = jax.jit(functools.partial(ncf_forward, block_b=block_b))
    out = jax.block_until_ready(fwd(users, apt, params))

    # Reference in plain f32 JAX (bf16 matmul inputs => ~1e-2-level drift).
    feats = jnp.concatenate([params["user_emb"][users],
                             params["apt_emb"][apt]], axis=1)
    h1 = jnp.maximum(feats @ params["w1"] + params["b1"], 0.0)
    h2 = jnp.maximum(h1 @ params["w2"] + params["b2"], 0.0)
    ref = jax.nn.sigmoid(jnp.maximum(h2, 0.0) @ params["wf"] + params["bf"])

    assert out.shape == (batch, 1)
    assert jnp.allclose(out, ref, atol=2e-2, rtol=0.0), \
        float(jnp.max(jnp.abs(out - ref)))

    print("KERNEL_OK")
</pallas_src>

<mosaic_0001>
module attributes {stable_mosaic.version = 11 : i64} {
  func.func @ncf_mlp_kernel(%arg0: i32, %arg1: memref<128x32xbf16, #tpu.memory_space<vmem>>, %arg2: memref<32x32xbf16, #tpu.memory_space<vmem>>, %arg3: memref<1x32xf32, #tpu.memory_space<vmem>>, %arg4: memref<32x16xbf16, #tpu.memory_space<vmem>>, %arg5: memref<1x16xf32, #tpu.memory_space<vmem>>, %arg6: memref<1x16xf32, #tpu.memory_space<vmem>>, %arg7: memref<1x1xf32, #tpu.memory_space<smem>>, %arg8: memref<1x128xf32, #tpu.memory_space<vmem>>) attributes {dimension_semantics = [#tpu.dimension_semantics<parallel>], iteration_bounds = array<i64: 2>, scalar_prefetch = 0 : i64, scratch_operands = 0 : i64, tpu.core_type = #tpu.core_type<tc>, window_params = [{transform_indices = @transform_0, window_bounds = array<i64: 128, 32>}, {pipeline_mode = #tpu.pipeline_mode<synchronous>, transform_indices = @transform_1, window_bounds = array<i64: 32, 32>}, {pipeline_mode = #tpu.pipeline_mode<synchronous>, transform_indices = @transform_2, window_bounds = array<i64: 1, 32>}, {pipeline_mode = #tpu.pipeline_mode<synchronous>, transform_indices = @transform_3, window_bounds = array<i64: 32, 16>}, {pipeline_mode = #tpu.pipeline_mode<synchronous>, transform_indices = @transform_4, window_bounds = array<i64: 1, 16>}, {pipeline_mode = #tpu.pipeline_mode<synchronous>, transform_indices = @transform_5, window_bounds = array<i64: 1, 16>}, {transform_indices = @transform_6, window_bounds = array<i64: 1, 1>}, {transform_indices = @transform_7, window_bounds = array<i64: 1, 128>}]} {
    %c0 = arith.constant 0 : index
    %c0_0 = arith.constant 0 : index
    %0 = vector.load %arg1[%c0, %c0_0] : memref<128x32xbf16, #tpu.memory_space<vmem>>, vector<128x32xbf16>
    %c0_1 = arith.constant 0 : index
    %c0_2 = arith.constant 0 : index
    %1 = vector.load %arg2[%c0_1, %c0_2] : memref<32x32xbf16, #tpu.memory_space<vmem>>, vector<32x32xbf16>
    %cst = arith.constant dense<0.000000e+00> : vector<128x32xf32>
    %2 = tpu.matmul %0, %1, %cst {dimension_numbers = #tpu.dot_dimension_numbers<[1], [0], [0], [1], [0, 0, 1, 1], [], []>} : vector<128x32xbf16>, vector<32x32xbf16>, vector<128x32xf32> -> vector<128x32xf32>
    %c0_3 = arith.constant 0 : index
    %c0_4 = arith.constant 0 : index
    %3 = vector.load %arg3[%c0_3, %c0_4] : memref<1x32xf32, #tpu.memory_space<vmem>>, vector<1x32xf32>
    %4 = vector.broadcast %3 : vector<1x32xf32> to vector<128x32xf32>
    %5 = arith.addf %2, %4 : vector<128x32xf32>
    %cst_5 = arith.constant 0.000000e+00 : f32
    %6 = vector.broadcast %cst_5 : f32 to vector<128x32xf32>
    %7 = arith.maximumf %5, %6 : vector<128x32xf32>
    %8 = arith.truncf %7 : vector<128x32xf32> to vector<128x32xbf16>
    %c0_6 = arith.constant 0 : index
    %c0_7 = arith.constant 0 : index
    %9 = vector.load %arg4[%c0_6, %c0_7] : memref<32x16xbf16, #tpu.memory_space<vmem>>, vector<32x16xbf16>
    %cst_8 = arith.constant dense<0.000000e+00> : vector<128x16xf32>
    %10 = tpu.matmul %8, %9, %cst_8 {dimension_numbers = #tpu.dot_dimension_numbers<[1], [0], [0], [1], [0, 0, 1, 1], [], []>} : vector<128x32xbf16>, vector<32x16xbf16>, vector<128x16xf32> -> vector<128x16xf32>
    %c0_9 = arith.constant 0 : index
    %c0_10 = arith.constant 0 : index
    %11 = vector.load %arg5[%c0_9, %c0_10] : memref<1x16xf32, #tpu.memory_space<vmem>>, vector<1x16xf32>
    %12 = vector.broadcast %11 : vector<1x16xf32> to vector<128x16xf32>
    %13 = arith.addf %10, %12 : vector<128x16xf32>
    %cst_11 = arith.constant 0.000000e+00 : f32
    %14 = vector.broadcast %cst_11 : f32 to vector<128x16xf32>
    %15 = arith.maximumf %13, %14 : vector<128x16xf32>
    %c0_12 = arith.constant 0 : index
    %c0_13 = arith.constant 0 : index
    %16 = vector.load %arg6[%c0_12, %c0_13] : memref<1x16xf32, #tpu.memory_space<vmem>>, vector<1x16xf32>
    %cst_14 = arith.constant dense<0.000000e+00> : vector<1x128xf32>
    %17 = tpu.matmul %16, %15, %cst_14 {dimension_numbers = #tpu.dot_dimension_numbers<[1], [1], [0], [0], [0, 0, 1, 0], [], []>} : vector<1x16xf32>, vector<128x16xf32>, vector<1x128xf32> -> vector<1x128xf32>
    %c0_15 = arith.constant 0 : index
    %c0_16 = arith.constant 0 : index
    %18 = memref.load %arg7[%c0_15, %c0_16] : memref<1x1xf32, #tpu.memory_space<smem>>
    %19 = vector.broadcast %18 : f32 to vector<1x128xf32>
    %20 = arith.addf %17, %19 : vector<1x128xf32>
    %21 = arith.negf %20 : vector<1x128xf32>
    %22 = math.exp %21 : vector<1x128xf32>
    %cst_17 = arith.constant 1.000000e+00 : f32
    %23 = vector.broadcast %cst_17 : f32 to vector<1x128xf32>
    %24 = arith.addf %23, %22 : vector<1x128xf32>
    %25 = arith.divf %23, %24 : vector<1x128xf32>
    %c0_18 = arith.constant 0 : index
    %c0_19 = arith.constant 0 : index
    %26 = vector.load %arg8[%c0_18, %c0_19] : memref<1x128xf32, #tpu.memory_space<vmem>>, vector<1x128xf32>
    tpu.vector_store %arg8[%c0_18, %c0_19], %25 {strides = array<i32>} : memref<1x128xf32, #tpu.memory_space<vmem>>, vector<1x128xf32>,
    return
  }
  func.func @transform_0(%arg0: i32) -> (i32, i32) {
    %c0_i32 = arith.constant 0 : i32
    %c0_i32_0 = arith.constant 0 : i32
    return %arg0, %c0_i32 : i32, i32
  }
  func.func @transform_1(%arg0: i32) -> (i32, i32) {
    %c0_i32 = arith.constant 0 : i32
    %c0_i32_0 = arith.constant 0 : i32
    %c0_i32_1 = arith.constant 0 : i32
    return %c0_i32, %c0_i32_0 : i32, i32
  }
  func.func @transform_2(%arg0: i32) -> (i32, i32) {
    %c0_i32 = arith.constant 0 : i32
    %c0_i32_0 = arith.constant 0 : i32
    %c0_i32_1 = arith.constant 0 : i32
    return %c0_i32, %c0_i32_0 : i32, i32
  }
  func.func @transform_3(%arg0: i32) -> (i32, i32) {
    %c0_i32 = arith.constant 0 : i32
    %c0_i32_0 = arith.constant 0 : i32
    %c0_i32_1 = arith.constant 0 : i32
    return %c0_i32, %c0_i32_0 : i32, i32
  }
  func.func @transform_4(%arg0: i32) -> (i32, i32) {
    %c0_i32 = arith.constant 0 : i32
    %c0_i32_0 = arith.constant 0 : i32
    %c0_i32_1 = arith.constant 0 : i32
    return %c0_i32, %c0_i32_0 : i32, i32
  }
  func.func @transform_5(%arg0: i32) -> (i32, i32) {
    %c0_i32 = arith.constant 0 : i32
    %c0_i32_0 = arith.constant 0 : i32
    %c0_i32_1 = arith.constant 0 : i32
    return %c0_i32, %c0_i32_0 : i32, i32
  }
  func.func @transform_6(%arg0: i32) -> (i32, i32) {
    %c0_i32 = arith.constant 0 : i32
    %c0_i32_0 = arith.constant 0 : i32
    %c0_i32_1 = arith.constant 0 : i32
    return %c0_i32, %c0_i32_0 : i32, i32
  }
  func.func @transform_7(%arg0: i32) -> (i32, i32) {
    %c0_i32 = arith.constant 0 : i32
    %c0_i32_0 = arith.constant 0 : i32
    return %c0_i32, %arg0 : i32, i32
  }
}

</mosaic_0001>

<llo_original>
// kernel: ncf_forward.1
$region0: #{ncf_forward.1}
  #allocation0 [shape = 'u32[]', space=smem, size = 0x4, offset = 0x4, fixed_abs, tag = 'smem constant byte address 0x4 - core index']
  #allocation1 [shape = 'u32[72,128]{1,0:T(1,128)}', space=vmem, size = 0x9000, scoped, tag = 'internal scratch']
  #allocation2 [shape = 'f32[1,1]{1,0:T(1,128)S(6)}', space=smem, size = 0x200, scoped, tag = 'scoped memory for ncf_forward.1']
  %s0 = inlined_call_operand.vmem [shape: bf16[256,32], index: 0, kind: input, shape index: {}]
  %s1 = inlined_call_operand.vmem [shape: bf16[32,32], index: 1, kind: input, shape index: {}]
  %s2 = inlined_call_operand.vmem [shape: f32[1,32], index: 2, kind: input, shape index: {}]
  %s3 = inlined_call_operand.vmem [shape: bf16[32,16], index: 3, kind: input, shape index: {}]
  %s4 = inlined_call_operand.vmem [shape: f32[1,16], index: 4, kind: input, shape index: {}]
  %s5 = inlined_call_operand.vmem [shape: f32[1,16], index: 5, kind: input, shape index: {}]
  %s6 = inlined_call_operand.<no memory space> [shape: f32[1,1], index: 6, kind: input, shape index: {}]
  %s7 = inlined_call_operand.vmem [shape: f32[1,256], index: 7, kind: output, shape index: {}]
  %s8 = sld [smem:[#allocation0]]
  $region61: #{ncf_forward.1} parent=0
    _
  %s10 = ssub.s32 1, %s8
  %s11 = scalar_select 0, %s10, %s8
  %12 = sst [smem:[#allocation2]] %s6
  loop: start=0, step=1, limit=4
  $region2: #{ncf_forward.1} parent=0 // loop_pre_header
    _
  $region3: #{ncf_forward.1} parent=0 // loop_header
    %s14 = sphi 0, %s18
    %p15 = scmp.ge.s32.totalorder %s14, 4
    %s24 = sphi 0, %s26
    %s27 = sphi 0, %s24
    %s28 = sphi 0, %s27
    %s44 = sphi 0, %s28
    %s48 = sphi 0, %s48
    %s50 = sphi 0, %s48
    %s51 = sphi 0, %s50
    %s65 = sphi 0, %s51
    %s69 = sphi 0, %s69
    %s71 = sphi 0, %s69
    %s72 = sphi 0, %s71
    %s86 = sphi 0, %s72
    %s90 = sphi 0, %s90
    %s92 = sphi 0, %s90
    %s93 = sphi 0, %s92
    %s107 = sphi 0, %s93
    %s111 = sphi 0, %s111
    %s113 = sphi 0, %s111
    %s114 = sphi 0, %s113
    %s128 = sphi 0, %s114
    %s132 = sphi 0, %s132
    %s134 = sphi 0, %s132
    %s135 = sphi 0, %s134
    %s149 = sphi 0, %s135
    %s153 = sphi 0, %s153
    %s155 = sphi 0, %s153
    %s156 = sphi 0, %s155
    %s170 = sphi 0, %s156
    %s176 = sphi 0, %s178
    %s179 = sphi 0, %s176
    %s180 = sphi 0, %s179
    %s196 = sphi 0, %s180
  $region4: #{ncf_forward.1} parent=0 // loop_header_branch
    %17 = sbr.rel (%p15) target = $region8
  $region5: #{ncf_forward.1} parent=0 // loop_body
    %s19 = ssub.s32 %s14, 1
    %s20 = ssub.s32 %s14, 2
    %s21 = sadd.s32 %s14, 1
    %s22 = ssub.s32 %s14, %s21
    %p23 = scmp.eq.s32.totalorder %s22, 0
    %s25 = sadd.s32 %s24, 1
    %s26 = scalar_select %p23, %s24, %s25
    %p29 = pneg %p23
    %p30 = scmp.eq.s32.totalorder %s14, 1
    %p31 = por %p29, %p30
    %p32 = scmp.ne.s32.totalorder %s24, %s27
    %p33 = scmp.eq.s32.totalorder %s14, 0
    %p34 = por %p32, %p33
    %p35 = scmp.ne.s32.totalorder %s24, %s27
    %p36 = scmp.eq.s32.totalorder %s19, 1
    %p37 = por %p35, %p36
    %p38 = scmp.ne.s32.totalorder %s27, %s28
    %p39 = scmp.eq.s32.totalorder %s19, 0
    %p40 = por %p38, %p39
    %p41 = scmp.ne.s32.totalorder %s27, %s28
    %p42 = scmp.eq.s32.totalorder %s20, 1
    %p43 = por %p41, %p42
    %p45 = scmp.ne.s32.totalorder %s28, %s44
    %p46 = scmp.eq.s32.totalorder %s20, 0
    %p47 = por %p45, %p46
    %s49 = sadd.s32 %s48, 1
    %p52 = scmp.eq.s32.totalorder %s14, 1
    %p53 = scmp.ne.s32.totalorder %s48, %s50
    %p54 = scmp.eq.s32.totalorder %s14, 0
    %p55 = por %p53, %p54
    %p56 = scmp.ne.s32.totalorder %s48, %s50
    %p57 = scmp.eq.s32.totalorder %s19, 1
    %p58 = por %p56, %p57
    %p59 = scmp.ne.s32.totalorder %s50, %s51
    %p60 = scmp.eq.s32.totalorder %s19, 0
    %p61 = por %p59, %p60
    %p62 = scmp.ne.s32.totalorder %s50, %s51
    %p63 = scmp.eq.s32.totalorder %s20, 1
    %p64 = por %p62, %p63
    %p66 = scmp.ne.s32.totalorder %s51, %s65
    %p67 = scmp.eq.s32.totalorder %s20, 0
    %p68 = por %p66, %p67
    %s70 = sadd.s32 %s69, 1
    %p73 = scmp.eq.s32.totalorder %s14, 1
    %p74 = scmp.ne.s32.totalorder %s69, %s71
    %p75 = scmp.eq.s32.totalorder %s14, 0
    %p76 = por %p74, %p75
    %p77 = scmp.ne.s32.totalorder %s69, %s71
    %p78 = scmp.eq.s32.totalorder %s19, 1
    %p79 = por %p77, %p78
    %p80 = scmp.ne.s32.totalorder %s71, %s72
    %p81 = scmp.eq.s32.totalorder %s19, 0
    %p82 = por %p80, %p81
    %p83 = scmp.ne.s32.totalorder %s71, %s72
    %p84 = scmp.eq.s32.totalorder %s20, 1
    %p85 = por %p83, %p84
    %p87 = scmp.ne.s32.totalorder %s72, %s86
    %p88 = scmp.eq.s32.totalorder %s20, 0
    %p89 = por %p87, %p88
    %s91 = sadd.s32 %s90, 1
    %p94 = scmp.eq.s32.totalorder %s14, 1
    %p95 = scmp.ne.s32.totalorder %s90, %s92
    %p96 = scmp.eq.s32.totalorder %s14, 0
    %p97 = por %p95, %p96
    %p98 = scmp.ne.s32.totalorder %s90, %s92
    %p99 = scmp.eq.s32.totalorder %s19, 1
    %p100 = por %p98, %p99
    %p101 = scmp.ne.s32.totalorder %s92, %s93
    %p102 = scmp.eq.s32.totalorder %s19, 0
    %p103 = por %p101, %p102
    %p104 = scmp.ne.s32.totalorder %s92, %s93
    %p105 = scmp.eq.s32.totalorder %s20, 1
    %p106 = por %p104, %p105
    %p108 = scmp.ne.s32.totalorder %s93, %s107
    %p109 = scmp.eq.s32.totalorder %s20, 0
    %p110 = por %p108, %p109
    %s112 = sadd.s32 %s111, 1
    %p115 = scmp.eq.s32.totalorder %s14, 1
    %p116 = scmp.ne.s32.totalorder %s111, %s113
    %p117 = scmp.eq.s32.totalorder %s14, 0
    %p118 = por %p116, %p117
    %p119 = scmp.ne.s32.totalorder %s111, %s113
    %p120 = scmp.eq.s32.totalorder %s19, 1
    %p121 = por %p119, %p120
    %p122 = scmp.ne.s32.totalorder %s113, %s114
    %p123 = scmp.eq.s32.totalorder %s19, 0
    %p124 = por %p122, %p123
    %p125 = scmp.ne.s32.totalorder %s113, %s114
    %p126 = scmp.eq.s32.totalorder %s20, 1
    %p127 = por %p125, %p126
    %p129 = scmp.ne.s32.totalorder %s114, %s128
    %p130 = scmp.eq.s32.totalorder %s20, 0
    %p131 = por %p129, %p130
    %s133 = sadd.s32 %s132, 1
    %p136 = scmp.eq.s32.totalorder %s14, 1
    %p137 = scmp.ne.s32.totalorder %s132, %s134
    %p138 = scmp.eq.s32.totalorder %s14, 0
    %p139 = por %p137, %p138
    %p140 = scmp.ne.s32.totalorder %s132, %s134
    %p141 = scmp.eq.s32.totalorder %s19, 1
    %p142 = por %p140, %p141
    %p143 = scmp.ne.s32.totalorder %s134, %s135
    %p144 = scmp.eq.s32.totalorder %s19, 0
    %p145 = por %p143, %p144
    %p146 = scmp.ne.s32.totalorder %s134, %s135
    %p147 = scmp.eq.s32.totalorder %s20, 1
    %p148 = por %p146, %p147
    %p150 = scmp.ne.s32.totalorder %s135, %s149
    %p151 = scmp.eq.s32.totalorder %s20, 0
    %p152 = por %p150, %p151
    %s154 = sadd.s32 %s153, 1
    %p157 = scmp.eq.s32.totalorder %s14, 1
    %p158 = scmp.ne.s32.totalorder %s153, %s155
    %p159 = scmp.eq.s32.totalorder %s14, 0
    %p160 = por %p158, %p159
    %p161 = scmp.ne.s32.totalorder %s153, %s155
    %p162 = scmp.eq.s32.totalorder %s19, 1
    %p163 = por %p161, %p162
    %p164 = scmp.ne.s32.totalorder %s155, %s156
    %p165 = scmp.eq.s32.totalorder %s19, 0
    %p166 = por %p164, %p165
    %p167 = scmp.ne.s32.totalorder %s155, %s156
    %p168 = scmp.eq.s32.totalorder %s20, 1
    %p169 = por %p167, %p168
    %p171 = scmp.ne.s32.totalorder %s156, %s170
    %p172 = scmp.eq.s32.totalorder %s20, 0
    %p173 = por %p171, %p172
    %s174 = ssub.s32 %s14, %s21
    %p175 = scmp.eq.s32.totalorder %s174, 0
    %s177 = sadd.s32 %s176, 1
    %s178 = scalar_select %p175, %s176, %s177
    %p181 = pneg %p175
    %p182 = scmp.eq.s32.totalorder %s14, 1
    %p183 = por %p181, %p182
    %p184 = scmp.ne.s32.totalorder %s176, %s179
    %p185 = scmp.eq.s32.totalorder %s14, 0
    %p186 = por %p184, %p185
    %p187 = scmp.ne.s32.totalorder %s176, %s179
    %p188 = scmp.eq.s32.totalorder %s19, 1
    %p189 = por %p187, %p188
    %p190 = scmp.ne.s32.totalorder %s179, %s180
    %p191 = scmp.eq.s32.totalorder %s19, 0
    %p192 = por %p190, %p191
    %p193 = scmp.ne.s32.totalorder %s179, %s180
    %p194 = scmp.eq.s32.totalorder %s20, 1
    %p195 = por %p193, %p194
    %p197 = scmp.ne.s32.totalorder %s180, %s196
    %p198 = scmp.eq.s32.totalorder %s20, 0
    %p199 = por %p197, %p198
    %p200 = scmp.le.s32.totalorder 1, %s14
    %p201 = scmp.lt.s32.totalorder %s14, 3
    %p202 = pnand %p200, %p201
    %p203 = pneg %p202
    // Predicated region
    $region9: #{ncf_forward.1} parent=5 // pred_check
      _
    $region10: #{ncf_forward.1} parent=5 // pred_check_branch
      %205 = sbr.rel (%p202) target = $region12
    $region11: #{ncf_forward.1} parent=5 // pred_region
      %s206 = ssub.s32 %s14, 1
      // Predicated region
      $region13: #{ncf_forward.1} parent=11 // pred_check
        %p207 = pneg %p61
      $region14: #{ncf_forward.1} parent=11 // pred_check_branch
        %209 = sbr.rel (%p207) target = $region16
      $region15: #{ncf_forward.1} parent=11 // pred_region
        _
      $region16: #{ncf_forward.1} parent=11 // pred_fallthru
        _
      // Predicated region
      $region17: #{ncf_forward.1} parent=11 // pred_check
        %p210 = pneg %p82
      $region18: #{ncf_forward.1} parent=11 // pred_check_branch
        %212 = sbr.rel (%p210) target = $region20
      $region19: #{ncf_forward.1} parent=11 // pred_region
        _
      $region20: #{ncf_forward.1} parent=11 // pred_fallthru
        _
      // Predicated region
      $region21: #{ncf_forward.1} parent=11 // pred_check
        %p213 = pneg %p103
      $region22: #{ncf_forward.1} parent=11 // pred_check_branch
        %215 = sbr.rel (%p213) target = $region24
      $region23: #{ncf_forward.1} parent=11 // pred_region
        _
      $region24: #{ncf_forward.1} parent=11 // pred_fallthru
        _
      // Predicated region
      $region25: #{ncf_forward.1} parent=11 // pred_check
        %p216 = pneg %p124
      $region26: #{ncf_forward.1} parent=11 // pred_check_branch
        %218 = sbr.rel (%p216) target = $region28
      $region27: #{ncf_forward.1} parent=11 // pred_region
        _
      $region28: #{ncf_forward.1} parent=11 // pred_fallthru
        _
      // Predicated region
      $region29: #{ncf_forward.1} parent=11 // pred_check
        %p219 = pneg %p145
      $region30: #{ncf_forward.1} parent=11 // pred_check_branch
        %221 = sbr.rel (%p219) target = $region32
      $region31: #{ncf_forward.1} parent=11 // pred_region
        _
      $region32: #{ncf_forward.1} parent=11 // pred_fallthru
        _
      // Predicated region
      $region33: #{ncf_forward.1} parent=11 // pred_check
        %p222 = pneg %p166
      $region34: #{ncf_forward.1} parent=11 // pred_check_branch
        %224 = sbr.rel (%p222) target = $region36
      $region35: #{ncf_forward.1} parent=11 // pred_region
        _
      $region36: #{ncf_forward.1} parent=11 // pred_fallthru
        _
    $region12: #{ncf_forward.1} parent=5 // pred_fallthru
      _
    %p225 = scmp.lt.s32.totalorder %s14, 2
    // Predicated region
    $region37: #{ncf_forward.1} parent=5 // pred_check
      %p226 = pneg %p225
    $region38: #{ncf_forward.1} parent=5 // pred_check_branch
      %228 = sbr.rel (%p226) target = $region40
    $region39: #{ncf_forward.1} parent=5 // pred_region
      // Predicated region
      $region41: #{ncf_forward.1} parent=39 // pred_check
        %p229 = pneg %p34
      $region42: #{ncf_forward.1} parent=39 // pred_check_branch
        %231 = sbr.rel (%p229) target = $region44
      $region43: #{ncf_forward.1} parent=39 // pred_region
        %s232 = smul.u32 16, %s14
        %p233 = scmp.lt.s32.totalorder %s232, 31
        %s234 = scalar_select %p233, %s232, 31
        %s235 = smul.addr %s234, 4
        %s236 = scalar_lea.vmem %s0, %s235
        %s237 = smul.u32 16, %s14
      $region44: #{ncf_forward.1} parent=39 // pred_fallthru
        _
    $region40: #{ncf_forward.1} parent=5 // pred_fallthru
      _
    %p238 = scmp.le.s32.totalorder 1, %s14
    %p239 = scmp.lt.s32.totalorder %s14, 3
    %p240 = pnand %p238, %p239
    %p241 = pneg %p240
    // Predicated region
    $region45: #{ncf_forward.1} parent=5 // pred_check
      _
    $region46: #{ncf_forward.1} parent=5 // pred_check_branch
      %243 = sbr.rel (%p240) target = $region48
    $region47: #{ncf_forward.1} parent=5 // pred_region
      %s244 = ssub.s32 %s14, 1
      %s245 = smul.u32 16, %s19
      %p246 = scmp.lt.s32.totalorder %s245, 31
      %s247 = scalar_select %p246, %s245, 31
      %s248 = smul.addr %s247, 4
      %s249 = scalar_lea.vmem %s0, %s248
      %p250 = pneg %p40
      %p251 = pneg %p37
      %p252 = pneg %p61
      %p253 = pneg %p58
      %p254 = pneg %p82
      %p255 = pneg %p79
      %p256 = pneg %p103
      %p257 = pneg %p100
      %p258 = pneg %p124
      %p259 = pneg %p121
      %p260 = pneg %p145
      %p261 = pneg %p142
      %p262 = pneg %p166
      %p263 = pneg %p163
      %p264 = pneg %p192
      %p265 = pneg %p189
      %p266 = scmp.lt.s32.totalorder %s19, 1
      %s267 = scalar_select %p266, %s19, 1
      %s268 = scalar_lea.vmem %s7, %s267
      %s269 = smul.u32 16, %s19
      %p270 = scmp.lt.s32.totalorder %s269, 31
      %s271 = scalar_select %p270, %s269, 31
      %s272 = smul.addr %s271, 4
      %s273 = scalar_lea.vmem %s0, %s272
      %s274 = smul.u32 16, %s19
      %p275 = scmp.lt.s32.totalorder %s19, 1
      %s276 = scalar_select %p275, %s19, 1
      %s277 = scalar_lea.vmem %s7, %s276
      %v279 = vld [vmem:[%s273] sm:$0xf]
      %v280 = vld [vmem:[%s273 + $0x4] sm:$0xf]
      %v281 = vld [vmem:[%s273 + $0x8] sm:$0xf]
      %v282 = vld [vmem:[%s273 + $0xc] sm:$0xf]
      %v283 = vld [vmem:[%s273 + $0x10] sm:$0xf]
      %v284 = vld [vmem:[%s273 + $0x14] sm:$0xf]
      %v285 = vld [vmem:[%s273 + $0x18] sm:$0xf]
      %v286 = vld [vmem:[%s273 + $0x1c] sm:$0xf]
      %v287 = vld [vmem:[%s273 + $0x20] sm:$0xf]
      %v288 = vld [vmem:[%s273 + $0x24] sm:$0xf]
      %v289 = vld [vmem:[%s273 + $0x28] sm:$0xf]
      %v290 = vld [vmem:[%s273 + $0x2c] sm:$0xf]
      %v291 = vld [vmem:[%s273 + $0x30] sm:$0xf]
      %v292 = vld [vmem:[%s273 + $0x34] sm:$0xf]
      %v293 = vld [vmem:[%s273 + $0x38] sm:$0xf]
      %v294 = vld [vmem:[%s273 + $0x3c] sm:$0xf]
      %v295 = vld [vmem:[%s1] sm:$0xf]
      %v296 = vld [vmem:[%s1 + $0x4] sm:$0xf]
      %v297 = vld [vmem:[%s1 + $0x8] sm:$0xf]
      %v298 = vld [vmem:[%s1 + $0xc] sm:$0xf]
      %v299 = vld [vmem:[%s2] sm:$0x1]
      %v301 = vperm.slane %v299, 0
      %v319 = vunpack.c.l.b16 %v279
      %v320 = vunpack.c.l.b16 %v280
      %v321 = vunpack.c.l.b16 %v281
      %v322 = vunpack.c.l.b16 %v282
      %v323 = vunpack.c.l.b16 %v283
      %v324 = vunpack.c.l.b16 %v284
      %v325 = vunpack.c.l.b16 %v285
      %v326 = vunpack.c.l.b16 %v286
      %v327 = vunpack.c.l.b16 %v287
      %v328 = vunpack.c.l.b16 %v288
      %v329 = vunpack.c.l.b16 %v289
      %v330 = vunpack.c.l.b16 %v290
      %v331 = vunpack.c.l.b16 %v291
      %v332 = vunpack.c.l.b16 %v292
      %v333 = vunpack.c.l.b16 %v293
      %v334 = vunpack.c.l.b16 %v294
      %v335 = vpack.c.b16 %v320, %v319
      %v336 = vpack.c.b16 %v322, %v321
      %v337 = vpack.c.b16 %v324, %v323
      %v338 = vpack.c.b16 %v326, %v325
      %v339 = vpack.c.b16 %v328, %v327
      %v340 = vpack.c.b16 %v330, %v329
      %v341 = vpack.c.b16 %v332, %v331
      %v342 = vpack.c.b16 %v334, %v333
      %v347 = vunpack.c.l.b16 %v295
      %v348 = vunpack.c.l.b16 %v296
      %v349 = vunpack.c.l.b16 %v297
      %v350 = vunpack.c.l.b16 %v298
      %v351 = vpack.c.b16 %v348, %v347
      %v352 = vpack.c.b16 %v350, %v349
      %vm355 = vcmask 261120
      %v357 = vsel %vm355, %v335, 0
      %v360 = vsel %vm355, %v336, 0
      %v363 = vsel %vm355, %v337, 0
      %v366 = vsel %vm355, %v338, 0
      %v369 = vsel %vm355, %v339, 0
      %v372 = vsel %vm355, %v340, 0
      %v375 = vsel %vm355, %v341, 0
      %v378 = vsel %vm355, %v342, 0
      %380 = vmatpush.bf16.msra.mxu0 0
      %381 = vmatpush.bf16.msra.mxu0 0
      %382 = vmatpush.bf16.msra.mxu0 0
      %383 = vmatpush.bf16.msra.mxu0 0
      %384 = vmatpush.bf16.msra.mxu0 0
      %385 = vmatpush.bf16.msra.mxu0 0
      %386 = vmatpush.bf16.msra.mxu0 %v352
      %387 = vmatpush.bf16.msra.mxu0 %v351
      %388 = vmatmul.bf16.gmra.mxu0 %v357
      %v389 = vpop.f32.mrf.mxu0
      %v390 = vadd.f32 %v301, %v389
      %v391 = vpop.f32.mrf.mxu0
      %v392 = vadd.f32 %v301, %v391
      %393 = vmatmul.bf16.gmra.mxu0 %v360
      %v394 = vpop.f32.mrf.mxu0
      %v395 = vadd.f32 %v301, %v394
      %v396 = vpop.f32.mrf.mxu0
      %v397 = vadd.f32 %v301, %v396
      %398 = vmatmul.bf16.gmra.mxu0 %v363
      %v399 = vpop.f32.mrf.mxu0
      %v400 = vadd.f32 %v301, %v399
      %v401 = vpop.f32.mrf.mxu0
      %v402 = vadd.f32 %v301, %v401
      %403 = vmatmul.bf16.gmra.mxu0 %v366
      %v404 = vpop.f32.mrf.mxu0
      %v405 = vadd.f32 %v301, %v404
      %v406 = vpop.f32.mrf.mxu0
      %v407 = vadd.f32 %v301, %v406
      %408 = vmatmul.bf16.gmra.mxu0 %v369
      %v409 = vpop.f32.mrf.mxu0
      %v410 = vadd.f32 %v301, %v409
      %v411 = vpop.f32.mrf.mxu0
      %v412 = vadd.f32 %v301, %v411
      %413 = vmatmul.bf16.gmra.mxu0 %v372
      %v414 = vpop.f32.mrf.mxu0
      %v415 = vadd.f32 %v301, %v414
      %v416 = vpop.f32.mrf.mxu0
      %v417 = vadd.f32 %v301, %v416
      %418 = vmatmul.bf16.gmra.mxu0 %v375
      %v419 = vpop.f32.mrf.mxu0
      %v420 = vadd.f32 %v301, %v419
      %v421 = vpop.f32.mrf.mxu0
      %v422 = vadd.f32 %v301, %v421
      %423 = vmatmul.bf16.gmra.mxu0 %v378
      %v424 = vpop.f32.mrf.mxu0
      %v425 = vadd.f32 %v301, %v424
      %v426 = vpop.f32.mrf.mxu0
      %v427 = vadd.f32 %v301, %v426
      %428 = vdwg.mxu0
      %v429 = vmax.f32 %v390, 0.0
      %v430 = vmax.f32 %v392, 0.0
      %v431 = vmax.f32 %v395, 0.0
      %v432 = vmax.f32 %v397, 0.0
      %v433 = vmax.f32 %v400, 0.0
      %v434 = vmax.f32 %v402, 0.0
      %v435 = vmax.f32 %v405, 0.0
      %v436 = vmax.f32 %v407, 0.0
      %v437 = vmax.f32 %v410, 0.0
      %v438 = vmax.f32 %v412, 0.0
      %v439 = vmax.f32 %v415, 0.0
      %v440 = vmax.f32 %v417, 0.0
      %v441 = vmax.f32 %v420, 0.0
      %v442 = vmax.f32 %v422, 0.0
      %v443 = vmax.f32 %v425, 0.0
      %v444 = vmax.f32 %v427, 0.0
      %v445 = vpack.c.bf16 %v430, %v429
      %v446 = vpack.c.bf16 %v432, %v431
      %v447 = vpack.c.bf16 %v434, %v433
      %v448 = vpack.c.bf16 %v436, %v435
      %v449 = vpack.c.bf16 %v438, %v437
      %v450 = vpack.c.bf16 %v440, %v439
      %v451 = vpack.c.bf16 %v442, %v441
      %v452 = vpack.c.bf16 %v444, %v443
      %v453 = vld [vmem:[%s3] sm:$0xf]
      %v454 = vld [vmem:[%s3 + $0x4] sm:$0xf]
      %v455 = vld [vmem:[%s3 + $0x8] sm:$0xf]
      %v456 = vld [vmem:[%s3 + $0xc] sm:$0xf]
      %v457 = vld [vmem:[%s4] sm:$0x1]
      %v459 = vperm.slane %v457, 0
      %v465 = vunpack.c.l.b16 %v453
      %v466 = vunpack.c.l.b16 %v454
      %v467 = vunpack.c.l.b16 %v455
      %v468 = vunpack.c.l.b16 %v456
      %v469 = vpack.c.b16 %v466, %v465
      %v470 = vpack.c.b16 %v468, %v467
      %v474 = vsel %vm355, %v445, 0
      %v477 = vsel %vm355, %v446, 0
      %v480 = vsel %vm355, %v447, 0
      %v483 = vsel %vm355, %v448, 0
      %v486 = vsel %vm355, %v449, 0
      %v489 = vsel %vm355, %v450, 0
      %v492 = vsel %vm355, %v451, 0
      %v495 = vsel %vm355, %v452, 0
      %497 = vmatpush.bf16.msra.mxu0 0
      %498 = vmatpush.bf16.msra.mxu0 0
      %499 = vmatpush.bf16.msra.mxu0 0
      %500 = vmatpush.bf16.msra.mxu0 0
      %501 = vmatpush.bf16.msra.mxu0 0
      %502 = vmatpush.bf16.msra.mxu0 0
      %503 = vmatpush.bf16.msra.mxu0 %v470
      %504 = vmatpush.bf16.msra.mxu0 %v469
      %505 = vmatmul.bf16.gmra.mxu0 %v474
      %v506 = vpop.f32.mrf.mxu0
      %v507 = vadd.f32 %v459, %v506
      %v508 = vpop.f32.mrf.mxu0
      %v509 = vadd.f32 %v459, %v508
      %510 = vmatmul.bf16.gmra.mxu0 %v477
      %v511 = vpop.f32.mrf.mxu0
      %v512 = vadd.f32 %v459, %v511
      %v513 = vpop.f32.mrf.mxu0
      %v514 = vadd.f32 %v459, %v513
      %515 = vmatmul.bf16.gmra.mxu0 %v480
      %v516 = vpop.f32.mrf.mxu0
      %v517 = vadd.f32 %v459, %v516
      %v518 = vpop.f32.mrf.mxu0
      %v519 = vadd.f32 %v459, %v518
      %520 = vmatmul.bf16.gmra.mxu0 %v483
      %v521 = vpop.f32.mrf.mxu0
      %v522 = vadd.f32 %v459, %v521
      %v523 = vpop.f32.mrf.mxu0
      %v524 = vadd.f32 %v459, %v523
      %525 = vmatmul.bf16.gmra.mxu0 %v486
      %v526 = vpop.f32.mrf.mxu0
      %v527 = vadd.f32 %v459, %v526
      %v528 = vpop.f32.mrf.mxu0
      %v529 = vadd.f32 %v459, %v528
      %530 = vmatmul.bf16.gmra.mxu0 %v489
      %v531 = vpop.f32.mrf.mxu0
      %v532 = vadd.f32 %v459, %v531
      %v533 = vpop.f32.mrf.mxu0
      %v534 = vadd.f32 %v459, %v533
      %535 = vmatmul.bf16.gmra.mxu0 %v492
      %v536 = vpop.f32.mrf.mxu0
      %v537 = vadd.f32 %v459, %v536
      %v538 = vpop.f32.mrf.mxu0
      %v539 = vadd.f32 %v459, %v538
      %540 = vmatmul.bf16.gmra.mxu0 %v495
      %v541 = vpop.f32.mrf.mxu0
      %v542 = vadd.f32 %v459, %v541
      %v543 = vpop.f32.mrf.mxu0
      %v544 = vadd.f32 %v459, %v543
      %545 = vdwg.mxu0
      %v546 = vmax.f32 %v507, 0.0
      %v547 = vmax.f32 %v509, 0.0
      %v548 = vmax.f32 %v512, 0.0
      %v549 = vmax.f32 %v514, 0.0
      %v550 = vmax.f32 %v517, 0.0
      %v551 = vmax.f32 %v519, 0.0
      %v552 = vmax.f32 %v522, 0.0
      %v553 = vmax.f32 %v524, 0.0
      %v554 = vmax.f32 %v527, 0.0
      %v555 = vmax.f32 %v529, 0.0
      %v556 = vmax.f32 %v532, 0.0
      %v557 = vmax.f32 %v534, 0.0
      %v558 = vmax.f32 %v537, 0.0
      %v559 = vmax.f32 %v539, 0.0
      %v560 = vmax.f32 %v542, 0.0
      %v561 = vmax.f32 %v544, 0.0
      %v562 = vld [vmem:[%s5] sm:$0x1]
      %s563 = sld [smem:[#allocation2]]
      %v564 = vstv %s563
      %vm565 = vcmask 130048
      %v567 = vsel %vm565, %v562, 0
      %v570 = vsel %vm565, %v546, 0
      %v573 = vsel %vm565, %v547, 0
      %v576 = vsel %vm565, %v548, 0
      %v579 = vsel %vm565, %v549, 0
      %v582 = vsel %vm565, %v550, 0
      %v585 = vsel %vm565, %v551, 0
      %v588 = vsel %vm565, %v552, 0
      %v591 = vsel %vm565, %v553, 0
      %v594 = vsel %vm565, %v554, 0
      %v597 = vsel %vm565, %v555, 0
      %v600 = vsel %vm565, %v556, 0
      %v603 = vsel %vm565, %v557, 0
      %v606 = vsel %vm565, %v558, 0
      %v609 = vsel %vm565, %v559, 0
      %v612 = vsel %vm565, %v560, 0
      %v615 = vsel %vm565, %v561, 0
      %617 = vmatpush.xpose.msra.mxu0 %v615
      %618 = vmatpush.xpose.msra.mxu0 %v612
      %619 = vmatpush.xpose.msra.mxu0 %v609
      %620 = vmatpush.xpose.msra.mxu0 %v606
      %621 = vmatpush.xpose.msra.mxu0 %v603
      %622 = vmatpush.xpose.msra.mxu0 %v600
      %623 = vmatpush.xpose.msra.mxu0 %v597
      %624 = vmatpush.xpose.msra.mxu0 %v594
      %625 = vmatpush.xpose.msra.mxu0 %v591
      %626 = vmatpush.xpose.msra.mxu0 %v588
      %627 = vmatpush.xpose.msra.mxu0 %v585
      %628 = vmatpush.xpose.msra.mxu0 %v582
      %629 = vmatpush.xpose.msra.mxu0 %v579
      %630 = vmatpush.xpose.msra.mxu0 %v576
      %631 = vmatpush.xpose.msra.mxu0 %v573
      %632 = vmatpush.xpose.msra.mxu0 %v570
      %633 = vmatmul.f32.gmra.mxu0 %v567
      %v634 = vpop.f32.mrf.mxu0
      %v635 = vadd.f32 %v564, %v634
      %636 = vdwg.mxu0
      %v637 = vxor.u32 %v635, 2147483648
      %v638 = vmul.f32 %v637, 1.442695
      %v639 = vpow.pop %v638
      %v640 = vadd.f32 %v639, 1.0
      %v641 = vrcp.pop %v640
      %v642 = vmul.f32 %v640, %v641
      %v643 = vsub.f32 1.0, %v642
      %v644 = vmul.f32 %v641, %v643
      %v645 = vadd.f32 %v641, %v644
      %vm646 = vweird.f32 %v640
      %vm647 = vweird.f32 %v641
      %vm648 = vmor %vm646, %vm647
      %v649 = vsel %vm648, %v641, %v645
      %v650 = vand.u32 2147483647, %v640
      %vm651 = vcmp.eq.f32.partialorder %v650, 8.507059e+37
      %v652 = vand.u32 %v640, 2147483648
      %v653 = vor.u32 1.1754944e-38, %v652
      %v654 = vsel %vm651, %v653, %v649
      %v655 = vmul.f32 1.0, %v654
      %656 = vst [vmem:[%s277] sm:$0x1] %v655
      %p657 = scmp.lt.s32.totalorder %s19, 1
      %s658 = scalar_select %p657, %s19, 1
      %s659 = scalar_lea.vmem %s7, %s658
      // Predicated region
      $region49: #{ncf_forward.1} parent=47 // pred_check
        %p660 = pneg %p189
      $region50: #{ncf_forward.1} parent=47 // pred_check_branch
        %662 = sbr.rel (%p660) target = $region52
      $region51: #{ncf_forward.1} parent=47 // pred_region
        _
      $region52: #{ncf_forward.1} parent=47 // pred_fallthru
        _
    $region48: #{ncf_forward.1} parent=5 // pred_fallthru
      _
    %p663 = scmp.le.s32.totalorder 2, %s14
    // Predicated region
    $region53: #{ncf_forward.1} parent=5 // pred_check
      %p664 = pneg %p663
    $region54: #{ncf_forward.1} parent=5 // pred_check_branch
      %666 = sbr.rel (%p664) target = $region56
    $region55: #{ncf_forward.1} parent=5 // pred_region
      %s667 = ssub.s32 %s14, 2
      // Predicated region
      $region57: #{ncf_forward.1} parent=55 // pred_check
        %p668 = pneg %p195
      $region58: #{ncf_forward.1} parent=55 // pred_check_branch
        %670 = sbr.rel (%p668) target = $region60
      $region59: #{ncf_forward.1} parent=55 // pred_region
        %p671 = scmp.lt.s32.totalorder %s20, 1
        %s672 = scalar_select %p671, %s20, 1
        %s673 = scalar_lea.vmem %s7, %s672
      $region60: #{ncf_forward.1} parent=55 // pred_fallthru
        _
    $region56: #{ncf_forward.1} parent=5 // pred_fallthru
      _
  $region6: #{ncf_forward.1} parent=0 // loop_footer
    %s18 = sadd.s32 1, %s14
  $region7: #{ncf_forward.1} parent=0 // loop_footer_branch
    %13 = sbr.rel target = $region3
  $region8: #{ncf_forward.1} parent=0 // loop_exit
    _

</llo_original>
